<compile_context>
chip_gen: v5e
topology: v5e:2x2
jax: 0.10.0
libtpu: 0.0.40
codegen_flags: <defaults>
</compile_context>

<pallas_src>
import functools

import jax
import jax.numpy as jnp
from jax.experimental import pallas as pl
from jax.experimental.pallas import tpu as pltpu


def _round_up(x, m):
    return (x + m - 1) // m * m


def _self_output_kernel(x_ref, res_ref, w_ref, b_ref, g_ref, beta_ref, o_ref,
                        *, eps, inv_h, pad_h, n_split):
    rt = x_ref.shape[0]
    half = rt // n_split

    w = w_ref[...]        # resident [in, out] weight, native dtype
    b = b_ref[...]        # f32 bias
    g = g_ref[...]        # gamma (f32, or bf16 on bf16 models)
    beta = beta_ref[...]  # beta  (same dtype as gamma)

    # Two independent row slabs -> MXU of one slab overlaps the VPU/XLU/EUP
    # LayerNorm epilogue of the other.
    for s in range(n_split):
        r0 = s * half
        x = x_ref[pl.ds(r0, half), :]
        res = res_ref[pl.ds(r0, half), :]

        # Native-dtype MXU matmul, f32 accumulation.
        h = jnp.dot(x, w, preferred_element_type=jnp.float32)
        h = h + b + res.astype(jnp.float32)

        # LayerNorm stats in f32, centered two-pass variance.
        # Padded hidden columns of h are exactly 0 (zero-padded x/res/W/bias),
        # so each contributes exactly mean^2 to sum(d*d); remove that with a
        # static correction and normalize by the REAL hidden size (inv_h).
        s1 = jnp.sum(h, axis=-1, keepdims=True)
        mean = s1 * inv_h
        d = h - mean
        s2 = jnp.sum(d * d, axis=-1, keepdims=True)
        if pad_h:
            s2 = s2 - pad_h * (mean * mean)
        var = jnp.maximum(s2 * inv_h, 0.0)
        inv = jax.lax.rsqrt(var + eps)

        # Normalize/affine in the param dtype (bf16 on bf16 models).  gamma and
        # beta are zero in padded columns, so padding never leaks into results.
        xn = (d * inv).astype(g.dtype)
        out = xn * g + beta
        o_ref[pl.ds(r0, half), :] = out.astype(o_ref.dtype)


def prepare_dense_weight(weight, *, matmul_dtype=None):
    """One-time prep of the PyTorch nn.Linear weight ([out, in]): transpose to
    [in, out], optional dtype cast, pad to a lane-dense multiple of 128.
    Hoist this out of the per-step path (call once at parameter load)."""
    h_out, h_in = weight.shape
    w = weight.T
    if matmul_dtype is not None and w.dtype != matmul_dtype:
        w = w.astype(matmul_dtype)
    hp_in = h_in if h_in % 128 == 0 else _round_up(h_in, 128)
    hp_out = h_out if h_out % 128 == 0 else _round_up(h_out, 128)
    if (hp_in, hp_out) != (h_in, h_out):
        w = jnp.pad(w, ((0, hp_in - h_in), (0, hp_out - h_out)))
    return w


def bert_self_output(hidden_states, input_tensor, weight, bias, gamma, beta, *,
                     eps=1e-12, row_tile=512, matmul_dtype=None,
                     weight_prepared=False):
    """hidden_states, input_tensor: [B, S, H].
    weight: PyTorch [out, in] weight, or (weight_prepared=True) the output of
    prepare_dense_weight()."""
    B, S, H = hidden_states.shape
    rows = B * S

    # Lane-dense hidden dim: pad only when H is not already a multiple of 128
    # (never for 768 / 1024) -> common case has NO wrapper-side activation copies.
    Hp = H if H % 128 == 0 else _round_up(H, 128)
    pad_h = Hp - H

    # Row tile: multiple of 8, default 512.  Rows are NOT padded: the grid uses
    # a ragged last tile (rows are independent in matmul and LN; Pallas masks
    # the out-of-bounds part of the final store).
    rt = min(row_tile, _round_up(rows, 8))
    rt = max(8, (rt // 8) * 8)
    ntiles = -(-rows // rt)
    # Megacore balance (v7x): prefer an even number of row tiles.
    if ntiles > 1 and ntiles % 2 == 1:
        target = ntiles + 1
        rt_even = max(8, _round_up(-(-rows // target), 8))
        if -(-rows // rt_even) == target:
            rt, ntiles = rt_even, target
    n_split = 2 if rt % 16 == 0 else 1

    x2 = hidden_states.reshape(rows, H)
    r2 = input_tensor.reshape(rows, H)
    if matmul_dtype is not None and x2.dtype != matmul_dtype:
        x2 = x2.astype(matmul_dtype)   # bf16 matmul inputs, f32 accumulation
    if pad_h:
        x2 = jnp.pad(x2, ((0, 0), (0, pad_h)))
        r2 = jnp.pad(r2, ((0, 0), (0, pad_h)))

    w_t = weight if weight_prepared else prepare_dense_weight(
        weight, matmul_dtype=matmul_dtype)
    assert w_t.shape == (Hp, Hp), (w_t.shape, Hp)

    # bias stays f32 (added into the f32 accumulator); gamma/beta in the
    # epilogue dtype (bf16 on bf16 models).
    param_dtype = (jnp.bfloat16 if hidden_states.dtype == jnp.bfloat16
                   else jnp.float32)
    b2 = jnp.pad(bias.astype(jnp.float32), (0, pad_h)).reshape(1, Hp)
    g2 = jnp.pad(gamma.astype(param_dtype), (0, pad_h)).reshape(1, Hp)
    be2 = jnp.pad(beta.astype(param_dtype), (0, pad_h)).reshape(1, Hp)

    out_dtype = hidden_states.dtype

    # VMEM budget: weight (worst case double-buffered for the fallback path) +
    # double-buffered x/res/out tiles + f32 intermediates + slack, clamped to
    # the chip's real VMEM capacity (64 MiB/TC on v7x).
    act_b = x2.dtype.itemsize
    res_b = r2.dtype.itemsize
    out_b = jnp.dtype(out_dtype).itemsize
    w_b = w_t.dtype.itemsize
    vmem_need = (2 * Hp * Hp * w_b
                 + 2 * rt * Hp * (act_b + res_b + out_b)
                 + 6 * (rt // n_split) * Hp * 4
                 + 3 * Hp * 4
                 + (2 << 20))
    try:
        cap = int(pltpu.get_tpu_info().vmem_capacity_bytes) - (8 << 20)
    except Exception:
        cap = 56 << 20  # conservative: v7x has 64 MiB per TensorCore
    vmem_limit = int(min(max(vmem_need, 16 << 20), cap))
    # TODO(synk): for hidden sizes >= ~2048 add a K-tiling grid axis ("arbitrary")
    # with an f32 accumulator so the weight block fits v7x's 64 MiB VMEM.

    kernel = functools.partial(_self_output_kernel, eps=eps, inv_h=1.0 / H,
                               pad_h=pad_h, n_split=n_split)

    def call(single_buffer_invariants):
        inv_kw = ({"pipeline_mode": pl.Buffered(1)}
                  if single_buffer_invariants else {})
        grid_spec = pltpu.PrefetchScalarGridSpec(
            num_scalar_prefetch=0,
            grid=(ntiles,),
            in_specs=[
                pl.BlockSpec((rt, Hp), lambda i: (i, 0)),            # x tile
                pl.BlockSpec((rt, Hp), lambda i: (i, 0)),            # residual
                pl.BlockSpec((Hp, Hp), lambda i: (0, 0), **inv_kw),  # weight
                pl.BlockSpec((1, Hp), lambda i: (0, 0), **inv_kw),   # bias
                pl.BlockSpec((1, Hp), lambda i: (0, 0), **inv_kw),   # gamma
                pl.BlockSpec((1, Hp), lambda i: (0, 0), **inv_kw),   # beta
            ],
            out_specs=pl.BlockSpec((rt, Hp), lambda i: (i, 0)),
        )
        return pl.pallas_call(
            kernel,
            out_shape=jax.ShapeDtypeStruct((rows, Hp), out_dtype),
            grid_spec=grid_spec,
            compiler_params=pltpu.CompilerParams(
                dimension_semantics=("parallel",),
                vmem_limit_bytes=vmem_limit,
            ),
        )(x2, r2, w_t, b2, g2, be2)

    try:
        # Invariant operands single-buffered (constant index_map -> 2nd buffer
        # would be dead VMEM).
        out2 = call(True)
    except Exception:
        out2 = call(False)

    if pad_h:
        out2 = out2[:, :H]
    return out2.reshape(B, S, H)


def _reference(hidden_states, input_tensor, weight, bias, gamma, beta, eps=1e-12):
    h = jnp.einsum("bsh,oh->bso", hidden_states, weight) + bias
    h = h + input_tensor
    mean = jnp.mean(h, axis=-1, keepdims=True)
    var = jnp.mean((h - mean) ** 2, axis=-1, keepdims=True)
    return (h - mean) * jax.lax.rsqrt(var + eps) * gamma + beta


if __name__ == "__main__":
    key = jax.random.PRNGKey(0)

    # --- Test 1: small f32, H not a multiple of 128 (exercises padded-H path) ---
    B, S, H = 2, 8, 32
    k1, k2, k3, k4, k5 = jax.random.split(key, 5)
    hidden_states = jax.random.normal(k1, (B, S, H), dtype=jnp.float32)
    input_tensor = jax.random.normal(k2, (B, S, H), dtype=jnp.float32)
    weight = jax.random.normal(k3, (H, H), dtype=jnp.float32) * 0.02  # [out, in]
    bias = jax.random.normal(k4, (H,), dtype=jnp.float32) * 0.01
    gamma = jnp.ones((H,), jnp.float32) + 0.1 * jax.random.normal(k5, (H,), jnp.float32)
    beta = jnp.zeros((H,), jnp.float32)

    out = bert_self_output(hidden_states, input_tensor, weight, bias, gamma, beta)
    out = jax.block_until_ready(out)
    ref = _reference(hidden_states, input_tensor, weight, bias, gamma, beta)
    assert out.shape == (B, S, H)
    assert jnp.allclose(out, ref, atol=1e-5, rtol=1e-5), "f32 mismatch vs reference"

    # --- Test 2: bf16, H multiple of 128, ragged last row tile, prepped weight ---
    B2, S2, H2 = 2, 24, 256
    j1, j2, j3, j4, j5 = jax.random.split(jax.random.PRNGKey(1), 5)
    hs2 = jax.random.normal(j1, (B2, S2, H2), dtype=jnp.float32)
    it2 = jax.random.normal(j2, (B2, S2, H2), dtype=jnp.float32)
    w2 = jax.random.normal(j3, (H2, H2), dtype=jnp.float32) * 0.02
    bi2 = jax.random.normal(j4, (H2,), dtype=jnp.float32) * 0.01
    ga2 = jnp.ones((H2,), jnp.float32) + 0.1 * jax.random.normal(j5, (H2,), jnp.float32)
    be_2 = jnp.zeros((H2,), jnp.float32)

    w2_prepped = prepare_dense_weight(w2.astype(jnp.bfloat16))  # hoisted, once
    out2 = bert_self_output(hs2.astype(jnp.bfloat16), it2.astype(jnp.bfloat16),
                            w2_prepped, bi2, ga2, be_2,
                            row_tile=32, weight_prepared=True)
    out2 = jax.block_until_ready(out2)
    ref2 = _reference(hs2.astype(jnp.bfloat16).astype(jnp.float32),
                      it2.astype(jnp.bfloat16).astype(jnp.float32),
                      w2.astype(jnp.bfloat16).astype(jnp.float32), bi2, ga2, be_2)
    assert out2.shape == (B2, S2, H2)
    assert jnp.allclose(out2.astype(jnp.float32), ref2, atol=5e-2, rtol=0), \
        "bf16 mismatch vs reference"

    print("KERNEL_OK")
</pallas_src>

<mosaic_0001>
module attributes {stable_mosaic.version = 11 : i64} {
  func.func @_self_output_kernel(%arg0: i32, %arg1: memref<16x128xf32, #tpu.memory_space<vmem>>, %arg2: memref<16x128xf32, #tpu.memory_space<vmem>>, %arg3: memref<128x128xf32, #tpu.memory_space<vmem>>, %arg4: memref<1x128xf32, #tpu.memory_space<vmem>>, %arg5: memref<1x128xf32, #tpu.memory_space<vmem>>, %arg6: memref<1x128xf32, #tpu.memory_space<vmem>>, %arg7: memref<16x128xf32, #tpu.memory_space<vmem>>) attributes {dimension_semantics = [#tpu.dimension_semantics<parallel>], iteration_bounds = array<i64: 1>, scalar_prefetch = 0 : i64, scratch_operands = 0 : i64, tpu.core_type = #tpu.core_type<tc>, window_params = [{transform_indices = @transform_0, window_bounds = array<i64: 16, 128>}, {transform_indices = @transform_1, window_bounds = array<i64: 16, 128>}, {pipeline_mode = #tpu.pipeline_mode<synchronous>, transform_indices = @transform_2, window_bounds = array<i64: 128, 128>}, {pipeline_mode = #tpu.pipeline_mode<synchronous>, transform_indices = @transform_3, window_bounds = array<i64: 1, 128>}, {pipeline_mode = #tpu.pipeline_mode<synchronous>, transform_indices = @transform_4, window_bounds = array<i64: 1, 128>}, {pipeline_mode = #tpu.pipeline_mode<synchronous>, transform_indices = @transform_5, window_bounds = array<i64: 1, 128>}, {transform_indices = @transform_6, window_bounds = array<i64: 16, 128>}]} {
    %c0 = arith.constant 0 : index
    %c0_0 = arith.constant 0 : index
    %0 = vector.load %arg3[%c0, %c0_0] : memref<128x128xf32, #tpu.memory_space<vmem>>, vector<128x128xf32>
    %c0_1 = arith.constant 0 : index
    %c0_2 = arith.constant 0 : index
    %1 = vector.load %arg4[%c0_1, %c0_2] : memref<1x128xf32, #tpu.memory_space<vmem>>, vector<1x128xf32>
    %c0_3 = arith.constant 0 : index
    %c0_4 = arith.constant 0 : index
    %2 = vector.load %arg5[%c0_3, %c0_4] : memref<1x128xf32, #tpu.memory_space<vmem>>, vector<1x128xf32>
    %c0_5 = arith.constant 0 : index
    %c0_6 = arith.constant 0 : index
    %3 = vector.load %arg6[%c0_5, %c0_6] : memref<1x128xf32, #tpu.memory_space<vmem>>, vector<1x128xf32>
    %c0_7 = arith.constant 0 : index
    %c0_8 = arith.constant 0 : index
    %4 = vector.load %arg1[%c0_7, %c0_8] : memref<16x128xf32, #tpu.memory_space<vmem>>, vector<8x128xf32>
    %c0_9 = arith.constant 0 : index
    %c0_10 = arith.constant 0 : index
    %5 = vector.load %arg2[%c0_9, %c0_10] : memref<16x128xf32, #tpu.memory_space<vmem>>, vector<8x128xf32>
    %cst = arith.constant dense<0.000000e+00> : vector<8x128xf32>
    %6 = tpu.matmul %4, %0, %cst {dimension_numbers = #tpu.dot_dimension_numbers<[1], [0], [0], [1], [0, 0, 1, 1], [], []>} : vector<8x128xf32>, vector<128x128xf32>, vector<8x128xf32> -> vector<8x128xf32>
    %7 = vector.broadcast %1 : vector<1x128xf32> to vector<8x128xf32>
    %8 = arith.addf %6, %7 : vector<8x128xf32>
    %9 = arith.addf %8, %5 : vector<8x128xf32>
    %cst_11 = arith.constant dense<0.000000e+00> : vector<8xf32>
    %10 = vector.multi_reduction <add>, %9, %cst_11 [1] : vector<8x128xf32> to vector<8xf32>
    %11 = vector.shape_cast %10 : vector<8xf32> to vector<8x1xf32>
    %cst_12 = arith.constant 3.125000e-02 : f32
    %12 = vector.broadcast %cst_12 : f32 to vector<8x1xf32>
    %13 = arith.mulf %11, %12 : vector<8x1xf32>
    %14 = vector.broadcast %13 : vector<8x1xf32> to vector<8x128xf32>
    %15 = arith.subf %9, %14 : vector<8x128xf32>
    %16 = arith.mulf %15, %15 : vector<8x128xf32>
    %cst_13 = arith.constant dense<0.000000e+00> : vector<8xf32>
    %17 = vector.multi_reduction <add>, %16, %cst_13 [1] : vector<8x128xf32> to vector<8xf32>
    %18 = vector.shape_cast %17 : vector<8xf32> to vector<8x1xf32>
    %19 = arith.mulf %13, %13 : vector<8x1xf32>
    %cst_14 = arith.constant 9.600000e+01 : f32
    %20 = vector.broadcast %cst_14 : f32 to vector<8x1xf32>
    %21 = arith.mulf %20, %19 : vector<8x1xf32>
    %22 = arith.subf %18, %21 : vector<8x1xf32>
    %cst_15 = arith.constant 3.125000e-02 : f32
    %23 = vector.broadcast %cst_15 : f32 to vector<8x1xf32>
    %24 = arith.mulf %22, %23 : vector<8x1xf32>
    %cst_16 = arith.constant 0.000000e+00 : f32
    %25 = vector.broadcast %cst_16 : f32 to vector<8x1xf32>
    %26 = arith.maximumf %24, %25 : vector<8x1xf32>
    %cst_17 = arith.constant 9.99999996E-13 : f32
    %27 = vector.broadcast %cst_17 : f32 to vector<8x1xf32>
    %28 = arith.addf %26, %27 : vector<8x1xf32>
    %29 = math.rsqrt %28 : vector<8x1xf32>
    %30 = vector.broadcast %29 : vector<8x1xf32> to vector<8x128xf32>
    %31 = arith.mulf %15, %30 : vector<8x128xf32>
    %32 = vector.broadcast %2 : vector<1x128xf32> to vector<8x128xf32>
    %33 = arith.mulf %31, %32 : vector<8x128xf32>
    %34 = vector.broadcast %3 : vector<1x128xf32> to vector<8x128xf32>
    %35 = arith.addf %33, %34 : vector<8x128xf32>
    %c0_18 = arith.constant 0 : index
    %c0_19 = arith.constant 0 : index
    %36 = vector.load %arg7[%c0_18, %c0_19] : memref<16x128xf32, #tpu.memory_space<vmem>>, vector<8x128xf32>
    tpu.vector_store %arg7[%c0_18, %c0_19], %35 {strides = array<i32>} : memref<16x128xf32, #tpu.memory_space<vmem>>, vector<8x128xf32>,
    %c8 = arith.constant 8 : index
    %c0_20 = arith.constant 0 : index
    %37 = vector.load %arg1[%c8, %c0_20] : memref<16x128xf32, #tpu.memory_space<vmem>>, vector<8x128xf32>
    %c8_21 = arith.constant 8 : index
    %c0_22 = arith.constant 0 : index
    %38 = vector.load %arg2[%c8_21, %c0_22] : memref<16x128xf32, #tpu.memory_space<vmem>>, vector<8x128xf32>
    %cst_23 = arith.constant dense<0.000000e+00> : vector<8x128xf32>
    %39 = tpu.matmul %37, %0, %cst_23 {dimension_numbers = #tpu.dot_dimension_numbers<[1], [0], [0], [1], [0, 0, 1, 1], [], []>} : vector<8x128xf32>, vector<128x128xf32>, vector<8x128xf32> -> vector<8x128xf32>
    %40 = vector.broadcast %1 : vector<1x128xf32> to vector<8x128xf32>
    %41 = arith.addf %39, %40 : vector<8x128xf32>
    %42 = arith.addf %41, %38 : vector<8x128xf32>
    %cst_24 = arith.constant dense<0.000000e+00> : vector<8xf32>
    %43 = vector.multi_reduction <add>, %42, %cst_24 [1] : vector<8x128xf32> to vector<8xf32>
    %44 = vector.shape_cast %43 : vector<8xf32> to vector<8x1xf32>
    %cst_25 = arith.constant 3.125000e-02 : f32
    %45 = vector.broadcast %cst_25 : f32 to vector<8x1xf32>
    %46 = arith.mulf %44, %45 : vector<8x1xf32>
    %47 = vector.broadcast %46 : vector<8x1xf32> to vector<8x128xf32>
    %48 = arith.subf %42, %47 : vector<8x128xf32>
    %49 = arith.mulf %48, %48 : vector<8x128xf32>
    %cst_26 = arith.constant dense<0.000000e+00> : vector<8xf32>
    %50 = vector.multi_reduction <add>, %49, %cst_26 [1] : vector<8x128xf32> to vector<8xf32>
    %51 = vector.shape_cast %50 : vector<8xf32> to vector<8x1xf32>
    %52 = arith.mulf %46, %46 : vector<8x1xf32>
    %cst_27 = arith.constant 9.600000e+01 : f32
    %53 = vector.broadcast %cst_27 : f32 to vector<8x1xf32>
    %54 = arith.mulf %53, %52 : vector<8x1xf32>
    %55 = arith.subf %51, %54 : vector<8x1xf32>
    %cst_28 = arith.constant 3.125000e-02 : f32
    %56 = vector.broadcast %cst_28 : f32 to vector<8x1xf32>
    %57 = arith.mulf %55, %56 : vector<8x1xf32>
    %cst_29 = arith.constant 0.000000e+00 : f32
    %58 = vector.broadcast %cst_29 : f32 to vector<8x1xf32>
    %59 = arith.maximumf %57, %58 : vector<8x1xf32>
    %cst_30 = arith.constant 9.99999996E-13 : f32
    %60 = vector.broadcast %cst_30 : f32 to vector<8x1xf32>
    %61 = arith.addf %59, %60 : vector<8x1xf32>
    %62 = math.rsqrt %61 : vector<8x1xf32>
    %63 = vector.broadcast %62 : vector<8x1xf32> to vector<8x128xf32>
    %64 = arith.mulf %48, %63 : vector<8x128xf32>
    %65 = vector.broadcast %2 : vector<1x128xf32> to vector<8x128xf32>
    %66 = arith.mulf %64, %65 : vector<8x128xf32>
    %67 = vector.broadcast %3 : vector<1x128xf32> to vector<8x128xf32>
    %68 = arith.addf %66, %67 : vector<8x128xf32>
    %c8_31 = arith.constant 8 : index
    %c0_32 = arith.constant 0 : index
    %69 = vector.load %arg7[%c8_31, %c0_32] : memref<16x128xf32, #tpu.memory_space<vmem>>, vector<8x128xf32>
    tpu.vector_store %arg7[%c8_31, %c0_32], %68 {strides = array<i32>} : memref<16x128xf32, #tpu.memory_space<vmem>>, vector<8x128xf32>,
    return
  }
  func.func @transform_0(%arg0: i32) -> (i32, i32) {
    %c0_i32 = arith.constant 0 : i32
    %c0_i32_0 = arith.constant 0 : i32
    return %arg0, %c0_i32 : i32, i32
  }
  func.func @transform_1(%arg0: i32) -> (i32, i32) {
    %c0_i32 = arith.constant 0 : i32
    %c0_i32_0 = arith.constant 0 : i32
    return %arg0, %c0_i32 : i32, i32
  }
  func.func @transform_2(%arg0: i32) -> (i32, i32) {
    %c0_i32 = arith.constant 0 : i32
    %c0_i32_0 = arith.constant 0 : i32
    %c0_i32_1 = arith.constant 0 : i32
    return %c0_i32, %c0_i32_0 : i32, i32
  }
  func.func @transform_3(%arg0: i32) -> (i32, i32) {
    %c0_i32 = arith.constant 0 : i32
    %c0_i32_0 = arith.constant 0 : i32
    %c0_i32_1 = arith.constant 0 : i32
    return %c0_i32, %c0_i32_0 : i32, i32
  }
  func.func @transform_4(%arg0: i32) -> (i32, i32) {
    %c0_i32 = arith.constant 0 : i32
    %c0_i32_0 = arith.constant 0 : i32
    %c0_i32_1 = arith.constant 0 : i32
    return %c0_i32, %c0_i32_0 : i32, i32
  }
  func.func @transform_5(%arg0: i32) -> (i32, i32) {
    %c0_i32 = arith.constant 0 : i32
    %c0_i32_0 = arith.constant 0 : i32
    %c0_i32_1 = arith.constant 0 : i32
    return %c0_i32, %c0_i32_0 : i32, i32
  }
  func.func @transform_6(%arg0: i32) -> (i32, i32) {
    %c0_i32 = arith.constant 0 : i32
    %c0_i32_0 = arith.constant 0 : i32
    return %arg0, %c0_i32 : i32, i32
  }
}

module attributes {stable_mosaic.version = 11 : i64} {
  func.func @_self_output_kernel(%arg0: i32, %arg1: memref<16x128xf32, #tpu.memory_space<vmem>>, %arg2: memref<16x128xf32, #tpu.memory_space<vmem>>, %arg3: memref<128x128xf32, #tpu.memory_space<vmem>>, %arg4: memref<1x128xf32, #tpu.memory_space<vmem>>, %arg5: memref<1x128xf32, #tpu.memory_space<vmem>>, %arg6: memref<1x128xf32, #tpu.memory_space<vmem>>, %arg7: memref<16x128xf32, #tpu.memory_space<vmem>>) attributes {dimension_semantics = [#tpu.dimension_semantics<parallel>], iteration_bounds = array<i64: 1>, scalar_prefetch = 0 : i64, scratch_operands = 0 : i64, tpu.core_type = #tpu.core_type<tc>, window_params = [{transform_indices = @transform_0, window_bounds = array<i64: 16, 128>}, {transform_indices = @transform_1, window_bounds = array<i64: 16, 128>}, {pipeline_mode = #tpu.pipeline_mode<synchronous>, transform_indices = @transform_2, window_bounds = array<i64: 128, 128>}, {pipeline_mode = #tpu.pipeline_mode<synchronous>, transform_indices = @transform_3, window_bounds = array<i64: 1, 128>}, {pipeline_mode = #tpu.pipeline_mode<synchronous>, transform_indices = @transform_4, window_bounds = array<i64: 1, 128>}, {pipeline_mode = #tpu.pipeline_mode<synchronous>, transform_indices = @transform_5, window_bounds = array<i64: 1, 128>}, {transform_indices = @transform_6, window_bounds = array<i64: 16, 128>}]} {
    %c0 = arith.constant 0 : index
    %c0_0 = arith.constant 0 : index
    %0 = vector.load %arg3[%c0, %c0_0] : memref<128x128xf32, #tpu.memory_space<vmem>>, vector<128x128xf32>
    %c0_1 = arith.constant 0 : index
    %c0_2 = arith.constant 0 : index
    %1 = vector.load %arg4[%c0_1, %c0_2] : memref<1x128xf32, #tpu.memory_space<vmem>>, vector<1x128xf32>
    %c0_3 = arith.constant 0 : index
    %c0_4 = arith.constant 0 : index
    %2 = vector.load %arg5[%c0_3, %c0_4] : memref<1x128xf32, #tpu.memory_space<vmem>>, vector<1x128xf32>
    %c0_5 = arith.constant 0 : index
    %c0_6 = arith.constant 0 : index
    %3 = vector.load %arg6[%c0_5, %c0_6] : memref<1x128xf32, #tpu.memory_space<vmem>>, vector<1x128xf32>
    %c0_7 = arith.constant 0 : index
    %c0_8 = arith.constant 0 : index
    %4 = vector.load %arg1[%c0_7, %c0_8] : memref<16x128xf32, #tpu.memory_space<vmem>>, vector<8x128xf32>
    %c0_9 = arith.constant 0 : index
    %c0_10 = arith.constant 0 : index
    %5 = vector.load %arg2[%c0_9, %c0_10] : memref<16x128xf32, #tpu.memory_space<vmem>>, vector<8x128xf32>
    %cst = arith.constant dense<0.000000e+00> : vector<8x128xf32>
    %6 = tpu.matmul %4, %0, %cst {dimension_numbers = #tpu.dot_dimension_numbers<[1], [0], [0], [1], [0, 0, 1, 1], [], []>} : vector<8x128xf32>, vector<128x128xf32>, vector<8x128xf32> -> vector<8x128xf32>
    %7 = vector.broadcast %1 : vector<1x128xf32> to vector<8x128xf32>
    %8 = arith.addf %6, %7 : vector<8x128xf32>
    %9 = arith.addf %8, %5 : vector<8x128xf32>
    %cst_11 = arith.constant dense<0.000000e+00> : vector<8xf32>
    %10 = vector.multi_reduction <add>, %9, %cst_11 [1] : vector<8x128xf32> to vector<8xf32>
    %11 = vector.shape_cast %10 : vector<8xf32> to vector<8x1xf32>
    %cst_12 = arith.constant 3.125000e-02 : f32
    %12 = vector.broadcast %cst_12 : f32 to vector<8x1xf32>
    %13 = arith.mulf %11, %12 : vector<8x1xf32>
    %14 = vector.broadcast %13 : vector<8x1xf32> to vector<8x128xf32>
    %15 = arith.subf %9, %14 : vector<8x128xf32>
    %16 = arith.mulf %15, %15 : vector<8x128xf32>
    %cst_13 = arith.constant dense<0.000000e+00> : vector<8xf32>
    %17 = vector.multi_reduction <add>, %16, %cst_13 [1] : vector<8x128xf32> to vector<8xf32>
    %18 = vector.shape_cast %17 : vector<8xf32> to vector<8x1xf32>
    %19 = arith.mulf %13, %13 : vector<8x1xf32>
    %cst_14 = arith.constant 9.600000e+01 : f32
    %20 = vector.broadcast %cst_14 : f32 to vector<8x1xf32>
    %21 = arith.mulf %20, %19 : vector<8x1xf32>
    %22 = arith.subf %18, %21 : vector<8x1xf32>
    %cst_15 = arith.constant 3.125000e-02 : f32
    %23 = vector.broadcast %cst_15 : f32 to vector<8x1xf32>
    %24 = arith.mulf %22, %23 : vector<8x1xf32>
    %cst_16 = arith.constant 0.000000e+00 : f32
    %25 = vector.broadcast %cst_16 : f32 to vector<8x1xf32>
    %26 = arith.maximumf %24, %25 : vector<8x1xf32>
    %cst_17 = arith.constant 9.99999996E-13 : f32
    %27 = vector.broadcast %cst_17 : f32 to vector<8x1xf32>
    %28 = arith.addf %26, %27 : vector<8x1xf32>
    %29 = math.rsqrt %28 : vector<8x1xf32>
    %30 = vector.broadcast %29 : vector<8x1xf32> to vector<8x128xf32>
    %31 = arith.mulf %15, %30 : vector<8x128xf32>
    %32 = vector.broadcast %2 : vector<1x128xf32> to vector<8x128xf32>
    %33 = arith.mulf %31, %32 : vector<8x128xf32>
    %34 = vector.broadcast %3 : vector<1x128xf32> to vector<8x128xf32>
    %35 = arith.addf %33, %34 : vector<8x128xf32>
    %c0_18 = arith.constant 0 : index
    %c0_19 = arith.constant 0 : index
    %36 = vector.load %arg7[%c0_18, %c0_19] : memref<16x128xf32, #tpu.memory_space<vmem>>, vector<8x128xf32>
    tpu.vector_store %arg7[%c0_18, %c0_19], %35 {strides = array<i32>} : memref<16x128xf32, #tpu.memory_space<vmem>>, vector<8x128xf32>,
    %c8 = arith.constant 8 : index
    %c0_20 = arith.constant 0 : index
    %37 = vector.load %arg1[%c8, %c0_20] : memref<16x128xf32, #tpu.memory_space<vmem>>, vector<8x128xf32>
    %c8_21 = arith.constant 8 : index
    %c0_22 = arith.constant 0 : index
    %38 = vector.load %arg2[%c8_21, %c0_22] : memref<16x128xf32, #tpu.memory_space<vmem>>, vector<8x128xf32>
    %cst_23 = arith.constant dense<0.000000e+00> : vector<8x128xf32>
    %39 = tpu.matmul %37, %0, %cst_23 {dimension_numbers = #tpu.dot_dimension_numbers<[1], [0], [0], [1], [0, 0, 1, 1], [], []>} : vector<8x128xf32>, vector<128x128xf32>, vector<8x128xf32> -> vector<8x128xf32>
    %40 = vector.broadcast %1 : vector<1x128xf32> to vector<8x128xf32>
    %41 = arith.addf %39, %40 : vector<8x128xf32>
    %42 = arith.addf %41, %38 : vector<8x128xf32>
    %cst_24 = arith.constant dense<0.000000e+00> : vector<8xf32>
    %43 = vector.multi_reduction <add>, %42, %cst_24 [1] : vector<8x128xf32> to vector<8xf32>
    %44 = vector.shape_cast %43 : vector<8xf32> to vector<8x1xf32>
    %cst_25 = arith.constant 3.125000e-02 : f32
    %45 = vector.broadcast %cst_25 : f32 to vector<8x1xf32>
    %46 = arith.mulf %44, %45 : vector<8x1xf32>
    %47 = vector.broadcast %46 : vector<8x1xf32> to vector<8x128xf32>
    %48 = arith.subf %42, %47 : vector<8x128xf32>
    %49 = arith.mulf %48, %48 : vector<8x128xf32>
    %cst_26 = arith.constant dense<0.000000e+00> : vector<8xf32>
    %50 = vector.multi_reduction <add>, %49, %cst_26 [1] : vector<8x128xf32> to vector<8xf32>
    %51 = vector.shape_cast %50 : vector<8xf32> to vector<8x1xf32>
    %52 = arith.mulf %46, %46 : vector<8x1xf32>
    %cst_27 = arith.constant 9.600000e+01 : f32
    %53 = vector.broadcast %cst_27 : f32 to vector<8x1xf32>
    %54 = arith.mulf %53, %52 : vector<8x1xf32>
    %55 = arith.subf %51, %54 : vector<8x1xf32>
    %cst_28 = arith.constant 3.125000e-02 : f32
    %56 = vector.broadcast %cst_28 : f32 to vector<8x1xf32>
    %57 = arith.mulf %55, %56 : vector<8x1xf32>
    %cst_29 = arith.constant 0.000000e+00 : f32
    %58 = vector.broadcast %cst_29 : f32 to vector<8x1xf32>
    %59 = arith.maximumf %57, %58 : vector<8x1xf32>
    %cst_30 = arith.constant 9.99999996E-13 : f32
    %60 = vector.broadcast %cst_30 : f32 to vector<8x1xf32>
    %61 = arith.addf %59, %60 : vector<8x1xf32>
    %62 = math.rsqrt %61 : vector<8x1xf32>
    %63 = vector.broadcast %62 : vector<8x1xf32> to vector<8x128xf32>
    %64 = arith.mulf %48, %63 : vector<8x128xf32>
    %65 = vector.broadcast %2 : vector<1x128xf32> to vector<8x128xf32>
    %66 = arith.mulf %64, %65 : vector<8x128xf32>
    %67 = vector.broadcast %3 : vector<1x128xf32> to vector<8x128xf32>
    %68 = arith.addf %66, %67 : vector<8x128xf32>
    %c8_31 = arith.constant 8 : index
    %c0_32 = arith.constant 0 : index
    %69 = vector.load %arg7[%c8_31, %c0_32] : memref<16x128xf32, #tpu.memory_space<vmem>>, vector<8x128xf32>
    tpu.vector_store %arg7[%c8_31, %c0_32], %68 {strides = array<i32>} : memref<16x128xf32, #tpu.memory_space<vmem>>, vector<8x128xf32>,
    return
  }
  func.func @transform_0(%arg0: i32) -> (i32, i32) {
    %c0_i32 = arith.constant 0 : i32
    %c0_i32_0 = arith.constant 0 : i32
    return %arg0, %c0_i32 : i32, i32
  }
  func.func @transform_1(%arg0: i32) -> (i32, i32) {
    %c0_i32 = arith.constant 0 : i32
    %c0_i32_0 = arith.constant 0 : i32
    return %arg0, %c0_i32 : i32, i32
  }
  func.func @transform_2(%arg0: i32) -> (i32, i32) {
    %c0_i32 = arith.constant 0 : i32
    %c0_i32_0 = arith.constant 0 : i32
    %c0_i32_1 = arith.constant 0 : i32
    return %c0_i32, %c0_i32_0 : i32, i32
  }
  func.func @transform_3(%arg0: i32) -> (i32, i32) {
    %c0_i32 = arith.constant 0 : i32
    %c0_i32_0 = arith.constant 0 : i32
    %c0_i32_1 = arith.constant 0 : i32
    return %c0_i32, %c0_i32_0 : i32, i32
  }
  func.func @transform_4(%arg0: i32) -> (i32, i32) {
    %c0_i32 = arith.constant 0 : i32
    %c0_i32_0 = arith.constant 0 : i32
    %c0_i32_1 = arith.constant 0 : i32
    return %c0_i32, %c0_i32_0 : i32, i32
  }
  func.func @transform_5(%arg0: i32) -> (i32, i32) {
    %c0_i32 = arith.constant 0 : i32
    %c0_i32_0 = arith.constant 0 : i32
    %c0_i32_1 = arith.constant 0 : i32
    return %c0_i32, %c0_i32_0 : i32, i32
  }
  func.func @transform_6(%arg0: i32) -> (i32, i32) {
    %c0_i32 = arith.constant 0 : i32
    %c0_i32_0 = arith.constant 0 : i32
    return %arg0, %c0_i32 : i32, i32
  }
}

</mosaic_0001>

<llo_original>
// kernel: tpu_custom_call.1
$region0: #{tpu_custom_call.1}
  #allocation0 [shape = 'u32[]', space=smem, size = 0x4, offset = 0x4, fixed_abs, tag = 'smem constant byte address 0x4 - core index']
  #allocation1 [shape = 'u32[72,128]{1,0:T(1,128)}', space=vmem, size = 0x9000, scoped, tag = 'internal scratch']
  %s0 = inlined_call_operand.hbm [shape: f32[16,128], index: 0, kind: input, shape index: {}]
  %s1 = inlined_call_operand.hbm [shape: f32[16,128], index: 1, kind: input, shape index: {}]
  %s2 = inlined_call_operand.hbm [shape: f32[128,128], index: 2, kind: input, shape index: {}]
  %s3 = inlined_call_operand.vmem [shape: f32[1,128], index: 3, kind: input, shape index: {}]
  %s4 = inlined_call_operand.vmem [shape: f32[1,128], index: 4, kind: input, shape index: {}]
  %s5 = inlined_call_operand.vmem [shape: f32[1,128], index: 5, kind: input, shape index: {}]
  %s6 = inlined_call_operand.hbm [shape: f32[16,128], index: 6, kind: output, shape index: {}]
  %s7 = sld [smem:[#allocation0]]
  $region46: #{tpu_custom_call.1} parent=0
    _
  %s9 = ssub.s32 1, %s7
  %s10 = scalar_select 0, %s9, %s7
  $region1: #{tpu_custom_call.1} parent=0
    #allocation2 [shape = 'u8[8192]{0}', space=vmem, size = 0x2000, scoped, tag = 'input window, operand 0, single buffered']
    #allocation3 [shape = 's32[1]{0}', space=sflag, size = 0x4, scoped, tag = 'scoped memory for tpu_custom_call.1']
    #allocation4 [shape = 's32[1]{0}', space=sflag, size = 0x4, scoped, tag = 'scoped memory for tpu_custom_call.1']
    #allocation5 [shape = 'u8[8192]{0}', space=vmem, size = 0x2000, scoped, tag = 'input window, operand 1, single buffered']
    #allocation6 [shape = 's32[1]{0}', space=sflag, size = 0x4, scoped, tag = 'scoped memory for tpu_custom_call.1']
    #allocation7 [shape = 'u8[65536]{0}', space=vmem, size = 0x10000, scoped, tag = 'input window, operand 2, single buffered']
    #allocation8 [shape = 'u8[8192]{0}', space=vmem, size = 0x2000, scoped, tag = 'output window, operand 0, single buffered']
    %11 = vsyncpa [#allocation3], 0
    %12 = vsyncpa [#allocation6], 0
    %13 = vsyncpa [#allocation4], 0
    // Predicated region
    $region2: #{tpu_custom_call.1} parent=1 // pred_check
      _
    $region3: #{tpu_custom_call.1} parent=1 // pred_check_branch
      %15 = sbr.rel (0) target = $region5
    $region4: #{tpu_custom_call.1} parent=1 // pred_region
      %17 = vsyncadd [#allocation3], 0
      %s18 = sshll.u32 %s0, 4
      %s19 = int_to_ptr.hbm [resolvable:$true] %s18
      %s20 = sshll.u32 [#allocation2], 4
      %s21 = int_to_ptr.vmem [resolvable:$true] %s20
      %26 = dma.hbm_to_vmem [thread:$0]  %s19, 256, %s21, [#allocation3], 128, 128, 8
    $region5: #{tpu_custom_call.1} parent=1 // pred_fallthru
      _
    // Predicated region
    $region6: #{tpu_custom_call.1} parent=1 // pred_check
      _
    $region7: #{tpu_custom_call.1} parent=1 // pred_check_branch
      %28 = sbr.rel (0) target = $region9
    $region8: #{tpu_custom_call.1} parent=1 // pred_region
      %30 = vsyncadd [#allocation6], 0
      %s31 = sshll.u32 %s1, 4
      %s32 = int_to_ptr.hbm [resolvable:$true] %s31
      %s33 = sshll.u32 [#allocation5], 4
      %s34 = int_to_ptr.vmem [resolvable:$true] %s33
      %39 = dma.hbm_to_vmem [thread:$0]  %s32, 256, %s34, [#allocation6], 128, 128, 8
    $region9: #{tpu_custom_call.1} parent=1 // pred_fallthru
      _
    // Predicated region
    $region10: #{tpu_custom_call.1} parent=1 // pred_check
      _
    $region11: #{tpu_custom_call.1} parent=1 // pred_check_branch
      %41 = sbr.rel (0) target = $region13
    $region12: #{tpu_custom_call.1} parent=1 // pred_region
      %43 = vsyncadd [#allocation6], 0
      %s44 = sshll.u32 %s2, 4
      %s45 = int_to_ptr.hbm [resolvable:$true] %s44
      %s46 = sshll.u32 [#allocation7], 4
      %s47 = int_to_ptr.vmem [resolvable:$true] %s46
      %52 = dma.hbm_to_vmem [thread:$0]  %s45, 2048, %s47, [#allocation6], 128, 128, 8
    $region13: #{tpu_custom_call.1} parent=1 // pred_fallthru
      _
    // Predicated region
    $region14: #{tpu_custom_call.1} parent=1 // pred_check
      _
    $region15: #{tpu_custom_call.1} parent=1 // pred_check_branch
      %54 = sbr.rel (0) target = $region17
    $region16: #{tpu_custom_call.1} parent=1 // pred_region
      _
    $region17: #{tpu_custom_call.1} parent=1 // pred_fallthru
      _
    // Predicated region
    $region18: #{tpu_custom_call.1} parent=1 // pred_check
      _
    $region19: #{tpu_custom_call.1} parent=1 // pred_check_branch
      %56 = sbr.rel (0) target = $region21
    $region20: #{tpu_custom_call.1} parent=1 // pred_region
      _
    $region21: #{tpu_custom_call.1} parent=1 // pred_fallthru
      _
    // Predicated region
    $region22: #{tpu_custom_call.1} parent=1 // pred_check
      _
    $region23: #{tpu_custom_call.1} parent=1 // pred_check_branch
      %58 = sbr.rel (0) target = $region25
    $region24: #{tpu_custom_call.1} parent=1 // pred_region
      _
    $region25: #{tpu_custom_call.1} parent=1 // pred_fallthru
      _
    // Predicated region
    $region26: #{tpu_custom_call.1} parent=1 // pred_check
      _
    $region27: #{tpu_custom_call.1} parent=1 // pred_check_branch
      %60 = sbr.rel (0) target = $region29
    $region28: #{tpu_custom_call.1} parent=1 // pred_region
      %62 = dma.done [#allocation3], 256
    $region29: #{tpu_custom_call.1} parent=1 // pred_fallthru
      _
    // Predicated region
    $region30: #{tpu_custom_call.1} parent=1 // pred_check
      _
    $region31: #{tpu_custom_call.1} parent=1 // pred_check_branch
      %64 = sbr.rel (0) target = $region33
    $region32: #{tpu_custom_call.1} parent=1 // pred_region
      %66 = dma.done [#allocation6], 256
    $region33: #{tpu_custom_call.1} parent=1 // pred_fallthru
      _
    // Predicated region
    $region34: #{tpu_custom_call.1} parent=1 // pred_check
      _
    $region35: #{tpu_custom_call.1} parent=1 // pred_check_branch
      %68 = sbr.rel (0) target = $region37
    $region36: #{tpu_custom_call.1} parent=1 // pred_region
      %70 = dma.done [#allocation6], 2048
    $region37: #{tpu_custom_call.1} parent=1 // pred_fallthru
      _
    %v71 = vld [vmem:[#allocation7] sm:$0xff]
    %v72 = vld [vmem:[#allocation7 + $0x8] sm:$0xff]
    %v73 = vld [vmem:[#allocation7 + $0x10] sm:$0xff]
    %v74 = vld [vmem:[#allocation7 + $0x18] sm:$0xff]
    %v75 = vld [vmem:[#allocation7 + $0x20] sm:$0xff]
    %v76 = vld [vmem:[#allocation7 + $0x28] sm:$0xff]
    %v77 = vld [vmem:[#allocation7 + $0x30] sm:$0xff]
    %v78 = vld [vmem:[#allocation7 + $0x38] sm:$0xff]
    %v79 = vld [vmem:[#allocation7 + $0x40] sm:$0xff]
    %v80 = vld [vmem:[#allocation7 + $0x48] sm:$0xff]
    %v81 = vld [vmem:[#allocation7 + $0x50] sm:$0xff]
    %v82 = vld [vmem:[#allocation7 + $0x58] sm:$0xff]
    %v83 = vld [vmem:[#allocation7 + $0x60] sm:$0xff]
    %v84 = vld [vmem:[#allocation7 + $0x68] sm:$0xff]
    %v85 = vld [vmem:[#allocation7 + $0x70] sm:$0xff]
    %v86 = vld [vmem:[#allocation7 + $0x78] sm:$0xff]
    %v87 = vld [vmem:[%s3] sm:$0x1]
    %v88 = vld [vmem:[%s4] sm:$0x1]
    %v89 = vld [vmem:[%s5] sm:$0x1]
    %v90 = vld [vmem:[#allocation2] sm:$0xff]
    %v91 = vld [vmem:[#allocation5] sm:$0xff]
    %v93 = vperm.slane %v87, 0
    %95 = vmatpush.msra.mxu0 %v86
    %96 = vmatpush.msra.mxu0 %v85
    %97 = vmatpush.msra.mxu0 %v84
    %98 = vmatpush.msra.mxu0 %v83
    %99 = vmatpush.msra.mxu0 %v82
    %100 = vmatpush.msra.mxu0 %v81
    %101 = vmatpush.msra.mxu0 %v80
    %102 = vmatpush.msra.mxu0 %v79
    %103 = vmatpush.msra.mxu0 %v78
    %104 = vmatpush.msra.mxu0 %v77
    %105 = vmatpush.msra.mxu0 %v76
    %106 = vmatpush.msra.mxu0 %v75
    %107 = vmatpush.msra.mxu0 %v74
    %108 = vmatpush.msra.mxu0 %v73
    %109 = vmatpush.msra.mxu0 %v72
    %110 = vmatpush.msra.mxu0 %v71
    %111 = vmatmul.f32.gmra.mxu0 %v90
    %v112 = vpop.f32.mrf.mxu0
    %v113 = vadd.f32 %v93, %v112
    %114 = vdwg.mxu0
    %v115 = vadd.f32 %v113, %v91
    %116 = vadd.xlane.f32.xlu0 %v115
    %v117 = vpop.xlane.xlu0 %116
    %v118 = vmul.f32 %v117, 0.03125
    %v119 = vsub.f32 %v115, %v118
    %v120 = vmul.f32 %v119, %v119
    %121 = vadd.xlane.f32.xlu0 %v120
    %v122 = vpop.xlane.xlu0 %121
    %v123 = vmul.f32 %v118, %v118
    %v124 = vmul.f32 %v123, 96.0
    %v125 = vsub.f32 %v122, %v124
    %v126 = vmul.f32 %v125, 0.03125
    %v127 = vmax.f32 %v126, 0.0
    %v128 = vadd.f32 %v127, 1e-12
    %v129 = vrsqrt.pop %v128
    %v130 = vmul.f32 %v129, %v128
    %v131 = vmul.f32 %v130, %v129
    %v132 = vmul.f32 0.5, %v131
    %v133 = vsub.f32 1.5, %v132
    %v134 = vmul.f32 %v129, %v133
    %vm135 = vweird.f32 %v128
    %vm136 = vweird.f32 %v129
    %vm137 = vmor %vm135, %vm136
    %v138 = vsel %vm137, %v129, %v134
    %v139 = vmul.f32 %v119, %v138
    %v141 = vperm.slane %v88, 0
    %v143 = vmul.f32 %v139, %v141
    %v145 = vperm.slane %v89, 0
    %v147 = vadd.f32 %v143, %v145
    %148 = vst [vmem:[#allocation8] sm:$0xff] %v147
    %v149 = vld [vmem:[#allocation2 + $0x8] sm:$0xff]
    %v150 = vld [vmem:[#allocation5 + $0x8] sm:$0xff]
    %151 = vmatpush.msra.mxu0 %v86
    %152 = vmatpush.msra.mxu0 %v85
    %153 = vmatpush.msra.mxu0 %v84
    %154 = vmatpush.msra.mxu0 %v83
    %155 = vmatpush.msra.mxu0 %v82
    %156 = vmatpush.msra.mxu0 %v81
    %157 = vmatpush.msra.mxu0 %v80
    %158 = vmatpush.msra.mxu0 %v79
    %159 = vmatpush.msra.mxu0 %v78
    %160 = vmatpush.msra.mxu0 %v77
    %161 = vmatpush.msra.mxu0 %v76
    %162 = vmatpush.msra.mxu0 %v75
    %163 = vmatpush.msra.mxu0 %v74
    %164 = vmatpush.msra.mxu0 %v73
    %165 = vmatpush.msra.mxu0 %v72
    %166 = vmatpush.msra.mxu0 %v71
    %167 = vmatmul.f32.gmra.mxu0 %v149
    %v168 = vpop.f32.mrf.mxu0
    %v169 = vadd.f32 %v93, %v168
    %170 = vdwg.mxu0
    %v171 = vadd.f32 %v169, %v150
    %172 = vadd.xlane.f32.xlu0 %v171
    %v173 = vpop.xlane.xlu0 %172
    %v174 = vmul.f32 %v173, 0.03125
    %v175 = vsub.f32 %v171, %v174
    %v176 = vmul.f32 %v175, %v175
    %177 = vadd.xlane.f32.xlu0 %v176
    %v178 = vpop.xlane.xlu0 %177
    %v179 = vmul.f32 %v174, %v174
    %v180 = vmul.f32 %v179, 96.0
    %v181 = vsub.f32 %v178, %v180
    %v182 = vmul.f32 %v181, 0.03125
    %v183 = vmax.f32 %v182, 0.0
    %v184 = vadd.f32 %v183, 1e-12
    %v185 = vrsqrt.pop %v184
    %v186 = vmul.f32 %v185, %v184
    %v187 = vmul.f32 %v186, %v185
    %v188 = vmul.f32 0.5, %v187
    %v189 = vsub.f32 1.5, %v188
    %v190 = vmul.f32 %v185, %v189
    %vm191 = vweird.f32 %v184
    %vm192 = vweird.f32 %v185
    %vm193 = vmor %vm191, %vm192
    %v194 = vsel %vm193, %v185, %v190
    %v195 = vmul.f32 %v175, %v194
    %v196 = vmul.f32 %v195, %v141
    %v197 = vadd.f32 %v196, %v145
    %198 = vst [vmem:[#allocation8 + $0x8] sm:$0xff] %v197
    // Predicated region
    $region38: #{tpu_custom_call.1} parent=1 // pred_check
      _
    $region39: #{tpu_custom_call.1} parent=1 // pred_check_branch
      %200 = sbr.rel (0) target = $region41
    $region40: #{tpu_custom_call.1} parent=1 // pred_region
      %202 = vsyncadd [#allocation4], 0
      %s203 = sshll.u32 [#allocation8], 4
      %s204 = int_to_ptr.vmem [resolvable:$true] %s203
      %s205 = sshll.u32 %s6, 4
      %s206 = int_to_ptr.hbm [resolvable:$true] %s205
      %211 = dma.vmem_to_hbm [thread:$0]  %s204, 256, %s206, [#allocation4], 128, 128, 8
    $region41: #{tpu_custom_call.1} parent=1 // pred_fallthru
      _
    // Predicated region
    $region42: #{tpu_custom_call.1} parent=1 // pred_check
      _
    $region43: #{tpu_custom_call.1} parent=1 // pred_check_branch
      %213 = sbr.rel (0) target = $region45
    $region44: #{tpu_custom_call.1} parent=1 // pred_region
      %215 = dma.done [#allocation4], 256
    $region45: #{tpu_custom_call.1} parent=1 // pred_fallthru
      _
    %216 = vsyncpa [#allocation3], 1
    %217 = vsyncpa [#allocation6], 1
    %218 = vsyncpa [#allocation4], 1

// kernel: tpu_custom_call.1
$region0: #{tpu_custom_call.1}
  #allocation0 [shape = 'u32[]', space=smem, size = 0x4, offset = 0x4, fixed_abs, tag = 'smem constant byte address 0x4 - core index']
  #allocation1 [shape = 'u32[72,128]{1,0:T(1,128)}', space=vmem, size = 0x9000, scoped, tag = 'internal scratch']
  %s0 = inlined_call_operand.hbm [shape: f32[16,128], index: 0, kind: input, shape index: {}]
  %s1 = inlined_call_operand.hbm [shape: f32[16,128], index: 1, kind: input, shape index: {}]
  %s2 = inlined_call_operand.hbm [shape: f32[128,128], index: 2, kind: input, shape index: {}]
  %s3 = inlined_call_operand.vmem [shape: f32[1,128], index: 3, kind: input, shape index: {}]
  %s4 = inlined_call_operand.vmem [shape: f32[1,128], index: 4, kind: input, shape index: {}]
  %s5 = inlined_call_operand.vmem [shape: f32[1,128], index: 5, kind: input, shape index: {}]
  %s6 = inlined_call_operand.hbm [shape: f32[16,128], index: 6, kind: output, shape index: {}]
  %s7 = sld [smem:[#allocation0]]
  $region46: #{tpu_custom_call.1} parent=0
    _
  %s9 = ssub.s32 1, %s7
  %s10 = scalar_select 0, %s9, %s7
  $region1: #{tpu_custom_call.1} parent=0
    #allocation2 [shape = 'u8[8192]{0}', space=vmem, size = 0x2000, scoped, tag = 'input window, operand 0, single buffered']
    #allocation3 [shape = 's32[1]{0}', space=sflag, size = 0x4, scoped, tag = 'scoped memory for tpu_custom_call.1']
    #allocation4 [shape = 's32[1]{0}', space=sflag, size = 0x4, scoped, tag = 'scoped memory for tpu_custom_call.1']
    #allocation5 [shape = 'u8[8192]{0}', space=vmem, size = 0x2000, scoped, tag = 'input window, operand 1, single buffered']
    #allocation6 [shape = 's32[1]{0}', space=sflag, size = 0x4, scoped, tag = 'scoped memory for tpu_custom_call.1']
    #allocation7 [shape = 'u8[65536]{0}', space=vmem, size = 0x10000, scoped, tag = 'input window, operand 2, single buffered']
    #allocation8 [shape = 'u8[8192]{0}', space=vmem, size = 0x2000, scoped, tag = 'output window, operand 0, single buffered']
    %11 = vsyncpa [#allocation3], 0
    %12 = vsyncpa [#allocation6], 0
    %13 = vsyncpa [#allocation4], 0
    // Predicated region
    $region2: #{tpu_custom_call.1} parent=1 // pred_check
      _
    $region3: #{tpu_custom_call.1} parent=1 // pred_check_branch
      %15 = sbr.rel (0) target = $region5
    $region4: #{tpu_custom_call.1} parent=1 // pred_region
      %17 = vsyncadd [#allocation3], 0
      %s18 = sshll.u32 %s0, 4
      %s19 = int_to_ptr.hbm [resolvable:$true] %s18
      %s20 = sshll.u32 [#allocation2], 4
      %s21 = int_to_ptr.vmem [resolvable:$true] %s20
      %26 = dma.hbm_to_vmem [thread:$0]  %s19, 256, %s21, [#allocation3], 128, 128, 8
    $region5: #{tpu_custom_call.1} parent=1 // pred_fallthru
      _
    // Predicated region
    $region6: #{tpu_custom_call.1} parent=1 // pred_check
      _
    $region7: #{tpu_custom_call.1} parent=1 // pred_check_branch
      %28 = sbr.rel (0) target = $region9
    $region8: #{tpu_custom_call.1} parent=1 // pred_region
      %30 = vsyncadd [#allocation6], 0
      %s31 = sshll.u32 %s1, 4
      %s32 = int_to_ptr.hbm [resolvable:$true] %s31
      %s33 = sshll.u32 [#allocation5], 4
      %s34 = int_to_ptr.vmem [resolvable:$true] %s33
      %39 = dma.hbm_to_vmem [thread:$0]  %s32, 256, %s34, [#allocation6], 128, 128, 8
    $region9: #{tpu_custom_call.1} parent=1 // pred_fallthru
      _
    // Predicated region
    $region10: #{tpu_custom_call.1} parent=1 // pred_check
      _
    $region11: #{tpu_custom_call.1} parent=1 // pred_check_branch
      %41 = sbr.rel (0) target = $region13
    $region12: #{tpu_custom_call.1} parent=1 // pred_region
      %43 = vsyncadd [#allocation6], 0
      %s44 = sshll.u32 %s2, 4
      %s45 = int_to_ptr.hbm [resolvable:$true] %s44
      %s46 = sshll.u32 [#allocation7], 4
      %s47 = int_to_ptr.vmem [resolvable:$true] %s46
      %52 = dma.hbm_to_vmem [thread:$0]  %s45, 2048, %s47, [#allocation6], 128, 128, 8
    $region13: #{tpu_custom_call.1} parent=1 // pred_fallthru
      _
    // Predicated region
    $region14: #{tpu_custom_call.1} parent=1 // pred_check
      _
    $region15: #{tpu_custom_call.1} parent=1 // pred_check_branch
      %54 = sbr.rel (0) target = $region17
    $region16: #{tpu_custom_call.1} parent=1 // pred_region
      _
    $region17: #{tpu_custom_call.1} parent=1 // pred_fallthru
      _
    // Predicated region
    $region18: #{tpu_custom_call.1} parent=1 // pred_check
      _
    $region19: #{tpu_custom_call.1} parent=1 // pred_check_branch
      %56 = sbr.rel (0) target = $region21
    $region20: #{tpu_custom_call.1} parent=1 // pred_region
      _
    $region21: #{tpu_custom_call.1} parent=1 // pred_fallthru
      _
    // Predicated region
    $region22: #{tpu_custom_call.1} parent=1 // pred_check
      _
    $region23: #{tpu_custom_call.1} parent=1 // pred_check_branch
      %58 = sbr.rel (0) target = $region25
    $region24: #{tpu_custom_call.1} parent=1 // pred_region
      _
    $region25: #{tpu_custom_call.1} parent=1 // pred_fallthru
      _
    // Predicated region
    $region26: #{tpu_custom_call.1} parent=1 // pred_check
      _
    $region27: #{tpu_custom_call.1} parent=1 // pred_check_branch
      %60 = sbr.rel (0) target = $region29
    $region28: #{tpu_custom_call.1} parent=1 // pred_region
      %62 = dma.done [#allocation3], 256
    $region29: #{tpu_custom_call.1} parent=1 // pred_fallthru
      _
    // Predicated region
    $region30: #{tpu_custom_call.1} parent=1 // pred_check
      _
    $region31: #{tpu_custom_call.1} parent=1 // pred_check_branch
      %64 = sbr.rel (0) target = $region33
    $region32: #{tpu_custom_call.1} parent=1 // pred_region
      %66 = dma.done [#allocation6], 256
    $region33: #{tpu_custom_call.1} parent=1 // pred_fallthru
      _
    // Predicated region
    $region34: #{tpu_custom_call.1} parent=1 // pred_check
      _
    $region35: #{tpu_custom_call.1} parent=1 // pred_check_branch
      %68 = sbr.rel (0) target = $region37
    $region36: #{tpu_custom_call.1} parent=1 // pred_region
      %70 = dma.done [#allocation6], 2048
    $region37: #{tpu_custom_call.1} parent=1 // pred_fallthru
      _
    %v71 = vld [vmem:[#allocation7] sm:$0xff]
    %v72 = vld [vmem:[#allocation7 + $0x8] sm:$0xff]
    %v73 = vld [vmem:[#allocation7 + $0x10] sm:$0xff]
    %v74 = vld [vmem:[#allocation7 + $0x18] sm:$0xff]
    %v75 = vld [vmem:[#allocation7 + $0x20] sm:$0xff]
    %v76 = vld [vmem:[#allocation7 + $0x28] sm:$0xff]
    %v77 = vld [vmem:[#allocation7 + $0x30] sm:$0xff]
    %v78 = vld [vmem:[#allocation7 + $0x38] sm:$0xff]
    %v79 = vld [vmem:[#allocation7 + $0x40] sm:$0xff]
    %v80 = vld [vmem:[#allocation7 + $0x48] sm:$0xff]
    %v81 = vld [vmem:[#allocation7 + $0x50] sm:$0xff]
    %v82 = vld [vmem:[#allocation7 + $0x58] sm:$0xff]
    %v83 = vld [vmem:[#allocation7 + $0x60] sm:$0xff]
    %v84 = vld [vmem:[#allocation7 + $0x68] sm:$0xff]
    %v85 = vld [vmem:[#allocation7 + $0x70] sm:$0xff]
    %v86 = vld [vmem:[#allocation7 + $0x78] sm:$0xff]
    %v87 = vld [vmem:[%s3] sm:$0x1]
    %v88 = vld [vmem:[%s4] sm:$0x1]
    %v89 = vld [vmem:[%s5] sm:$0x1]
    %v90 = vld [vmem:[#allocation2] sm:$0xff]
    %v91 = vld [vmem:[#allocation5] sm:$0xff]
    %v93 = vperm.slane %v87, 0
    %95 = vmatpush.msra.mxu0 %v86
    %96 = vmatpush.msra.mxu0 %v85
    %97 = vmatpush.msra.mxu0 %v84
    %98 = vmatpush.msra.mxu0 %v83
    %99 = vmatpush.msra.mxu0 %v82
    %100 = vmatpush.msra.mxu0 %v81
    %101 = vmatpush.msra.mxu0 %v80
    %102 = vmatpush.msra.mxu0 %v79
    %103 = vmatpush.msra.mxu0 %v78
    %104 = vmatpush.msra.mxu0 %v77
    %105 = vmatpush.msra.mxu0 %v76
    %106 = vmatpush.msra.mxu0 %v75
    %107 = vmatpush.msra.mxu0 %v74
    %108 = vmatpush.msra.mxu0 %v73
    %109 = vmatpush.msra.mxu0 %v72
    %110 = vmatpush.msra.mxu0 %v71
    %111 = vmatmul.f32.gmra.mxu0 %v90
    %v112 = vpop.f32.mrf.mxu0
    %v113 = vadd.f32 %v93, %v112
    %114 = vdwg.mxu0
    %v115 = vadd.f32 %v113, %v91
    %116 = vadd.xlane.f32.xlu0 %v115
    %v117 = vpop.xlane.xlu0 %116
    %v118 = vmul.f32 %v117, 0.03125
    %v119 = vsub.f32 %v115, %v118
    %v120 = vmul.f32 %v119, %v119
    %121 = vadd.xlane.f32.xlu0 %v120
    %v122 = vpop.xlane.xlu0 %121
    %v123 = vmul.f32 %v118, %v118
    %v124 = vmul.f32 %v123, 96.0
    %v125 = vsub.f32 %v122, %v124
    %v126 = vmul.f32 %v125, 0.03125
    %v127 = vmax.f32 %v126, 0.0
    %v128 = vadd.f32 %v127, 1e-12
    %v129 = vrsqrt.pop %v128
    %v130 = vmul.f32 %v129, %v128
    %v131 = vmul.f32 %v130, %v129
    %v132 = vmul.f32 0.5, %v131
    %v133 = vsub.f32 1.5, %v132
    %v134 = vmul.f32 %v129, %v133
    %vm135 = vweird.f32 %v128
    %vm136 = vweird.f32 %v129
    %vm137 = vmor %vm135, %vm136
    %v138 = vsel %vm137, %v129, %v134
    %v139 = vmul.f32 %v119, %v138
    %v141 = vperm.slane %v88, 0
    %v143 = vmul.f32 %v139, %v141
    %v145 = vperm.slane %v89, 0
    %v147 = vadd.f32 %v143, %v145
    %148 = vst [vmem:[#allocation8] sm:$0xff] %v147
    %v149 = vld [vmem:[#allocation2 + $0x8] sm:$0xff]
    %v150 = vld [vmem:[#allocation5 + $0x8] sm:$0xff]
    %151 = vmatpush.msra.mxu0 %v86
    %152 = vmatpush.msra.mxu0 %v85
    %153 = vmatpush.msra.mxu0 %v84
    %154 = vmatpush.msra.mxu0 %v83
    %155 = vmatpush.msra.mxu0 %v82
    %156 = vmatpush.msra.mxu0 %v81
    %157 = vmatpush.msra.mxu0 %v80
    %158 = vmatpush.msra.mxu0 %v79
    %159 = vmatpush.msra.mxu0 %v78
    %160 = vmatpush.msra.mxu0 %v77
    %161 = vmatpush.msra.mxu0 %v76
    %162 = vmatpush.msra.mxu0 %v75
    %163 = vmatpush.msra.mxu0 %v74
    %164 = vmatpush.msra.mxu0 %v73
    %165 = vmatpush.msra.mxu0 %v72
    %166 = vmatpush.msra.mxu0 %v71
    %167 = vmatmul.f32.gmra.mxu0 %v149
    %v168 = vpop.f32.mrf.mxu0
    %v169 = vadd.f32 %v93, %v168
    %170 = vdwg.mxu0
    %v171 = vadd.f32 %v169, %v150
    %172 = vadd.xlane.f32.xlu0 %v171
    %v173 = vpop.xlane.xlu0 %172
    %v174 = vmul.f32 %v173, 0.03125
    %v175 = vsub.f32 %v171, %v174
    %v176 = vmul.f32 %v175, %v175
    %177 = vadd.xlane.f32.xlu0 %v176
    %v178 = vpop.xlane.xlu0 %177
    %v179 = vmul.f32 %v174, %v174
    %v180 = vmul.f32 %v179, 96.0
    %v181 = vsub.f32 %v178, %v180
    %v182 = vmul.f32 %v181, 0.03125
    %v183 = vmax.f32 %v182, 0.0
    %v184 = vadd.f32 %v183, 1e-12
    %v185 = vrsqrt.pop %v184
    %v186 = vmul.f32 %v185, %v184
    %v187 = vmul.f32 %v186, %v185
    %v188 = vmul.f32 0.5, %v187
    %v189 = vsub.f32 1.5, %v188
    %v190 = vmul.f32 %v185, %v189
    %vm191 = vweird.f32 %v184
    %vm192 = vweird.f32 %v185
    %vm193 = vmor %vm191, %vm192
    %v194 = vsel %vm193, %v185, %v190
    %v195 = vmul.f32 %v175, %v194
    %v196 = vmul.f32 %v195, %v141
    %v197 = vadd.f32 %v196, %v145
    %198 = vst [vmem:[#allocation8 + $0x8] sm:$0xff] %v197
    // Predicated region
    $region38: #{tpu_custom_call.1} parent=1 // pred_check
      _
    $region39: #{tpu_custom_call.1} parent=1 // pred_check_branch
      %200 = sbr.rel (0) target = $region41
    $region40: #{tpu_custom_call.1} parent=1 // pred_region
      %202 = vsyncadd [#allocation4], 0
      %s203 = sshll.u32 [#allocation8], 4
      %s204 = int_to_ptr.vmem [resolvable:$true] %s203
      %s205 = sshll.u32 %s6, 4
      %s206 = int_to_ptr.hbm [resolvable:$true] %s205
      %211 = dma.vmem_to_hbm [thread:$0]  %s204, 256, %s206, [#allocation4], 128, 128, 8
    $region41: #{tpu_custom_call.1} parent=1 // pred_fallthru
      _
    // Predicated region
    $region42: #{tpu_custom_call.1} parent=1 // pred_check
      _
    $region43: #{tpu_custom_call.1} parent=1 // pred_check_branch
      %213 = sbr.rel (0) target = $region45
    $region44: #{tpu_custom_call.1} parent=1 // pred_region
      %215 = dma.done [#allocation4], 256
    $region45: #{tpu_custom_call.1} parent=1 // pred_fallthru
      _
    %216 = vsyncpa [#allocation3], 1
    %217 = vsyncpa [#allocation6], 1
    %218 = vsyncpa [#allocation4], 1

</llo_original>
